<compile_context>
chip_gen: v7x
topology: tpu7x:2x2x1
jax: 0.10.0
libtpu: 0.0.40
codegen_flags: <defaults>
</compile_context>

<pallas_src>
import functools

import jax
import jax.numpy as jnp
from jax.experimental import pallas as pl
from jax.experimental.pallas import tpu as pltpu


def _adv_loss_kernel(logits_ref, targets_ref, out_ref, *, kappa, targeted,
                     inv_b):
    # Native-dtype load, cast once in-kernel (needed on v5e anyway).
    logits = logits_ref[...].astype(jnp.float32)            # (B, K)
    tgt = targets_ref[...]                                   # (B, 1) int32
    B, K = logits.shape

    # Target mask via 2-D iota compare (TPU requires >=2D iota). No f32
    # one-hot materialization -- selects only.
    col = jax.lax.broadcasted_iota(jnp.int32, (B, K), 1)     # (B, K)
    mask = col == tgt                                         # (B, K) bool

    # real logit: logit at the target class.
    real = jnp.sum(jnp.where(mask, logits, 0.0), axis=1, keepdims=True)
    # best "other" logit: target slot forced to -1e4, matching the PyTorch
    # expression (1 - one_hot) * logits - one_hot * 10000.
    other = jnp.max(jnp.where(mask, jnp.float32(-10000.0), logits),
                    axis=1, keepdims=True)

    if targeted:
        loss = jnp.maximum(other - real + kappa, 0.0)         # (B, 1)
    else:
        loss = jnp.maximum(real - other + kappa, 0.0)         # (B, 1)

    # Batch mean: fold 1/B in as a VPU multiply, then full-reduce to a
    # scalar and store it straight into SMEM (no padded VMEM writeback).
    out_ref[0, 0] = jnp.sum(loss * inv_b)


def logits_adv_loss(logits, targets, *, kappa=0.0, mode="targeted"):
    """Pallas equivalent of LogitsAdvLoss.forward.

    Args:
      logits:  [B, K] float array (any float dtype; cast to f32 in-kernel).
      targets: [B] or [B, 1] integer array of attack target classes.
    Returns:
      scalar float32 loss (mean over batch).
    """
    B, K = logits.shape
    targets = jnp.reshape(targets, (B, 1)).astype(jnp.int32)
    targeted = mode.lower() == "targeted"

    out = pl.pallas_call(
        functools.partial(_adv_loss_kernel, kappa=float(kappa),
                          targeted=targeted, inv_b=1.0 / float(B)),
        out_shape=jax.ShapeDtypeStruct((1, 1), jnp.float32),
        in_specs=[
            pl.BlockSpec(memory_space=pltpu.MemorySpace.VMEM),
            pl.BlockSpec(memory_space=pltpu.MemorySpace.VMEM),
        ],
        out_specs=pl.BlockSpec(memory_space=pltpu.MemorySpace.SMEM),
    )(logits, targets)
    return out[0, 0]


def _reference(logits, targets, kappa=0.0, mode="targeted"):
    """Pure-JAX reference mirroring the PyTorch module, for verification."""
    logits = logits.astype(jnp.float32)
    B, K = logits.shape
    t = jnp.reshape(targets, (B,)).astype(jnp.int32)
    one_hot = jax.nn.one_hot(t, K, dtype=jnp.float32)
    real = jnp.sum(one_hot * logits, axis=1)
    other = jnp.max((1.0 - one_hot) * logits - one_hot * 10000.0, axis=1)
    if mode.lower() == "targeted":
        loss = jnp.maximum(other - real + kappa, 0.0)
    else:
        loss = jnp.maximum(real - other + kappa, 0.0)
    return jnp.mean(loss)


if __name__ == "__main__":
    key = jax.random.PRNGKey(0)
    k1, k2 = jax.random.split(key)

    B, K = 8, 40  # batch of 8, 40 classes (ModelNet40-style head)
    logits_f32 = jax.random.normal(k1, (B, K), dtype=jnp.float32) * 5.0
    targets = jax.random.randint(k2, (B,), 0, K, dtype=jnp.int32)

    for dtype in (jnp.float32, jnp.bfloat16):
        logits = logits_f32.astype(dtype)
        for mode in ("targeted", "untargeted"):
            for kappa in (0.0, 0.5):
                got = jax.block_until_ready(
                    logits_adv_loss(logits, targets, kappa=kappa, mode=mode))
                want = _reference(logits, targets, kappa=kappa, mode=mode)
                assert jnp.allclose(got, want, atol=1e-4, rtol=1e-4), (
                    str(dtype), mode, kappa, got, want)

    print("KERNEL_OK")
</pallas_src>

<mosaic_0001>
module attributes {stable_mosaic.version = 11 : i64} {
  func.func @_adv_loss_kernel(%arg0: memref<8x40xf32, #tpu.memory_space<vmem>>, %arg1: memref<8x1xi32, #tpu.memory_space<vmem>>, %arg2: memref<1x1xf32, #tpu.memory_space<smem>>) attributes {dimension_semantics = [], scalar_prefetch = 0 : i64, scratch_operands = 0 : i64, tpu.core_type = #tpu.core_type<tc>} {
    %c0 = arith.constant 0 : index
    %c0_0 = arith.constant 0 : index
    %0 = vector.load %arg0[%c0, %c0_0] : memref<8x40xf32, #tpu.memory_space<vmem>>, vector<8x40xf32>
    %c0_1 = arith.constant 0 : index
    %c0_2 = arith.constant 0 : index
    %1 = vector.load %arg1[%c0_1, %c0_2] : memref<8x1xi32, #tpu.memory_space<vmem>>, vector<8x1xi32>
    %2 = tpu.iota {dimensions = array<i32: 1>} : vector<8x40xi32>
    %3 = vector.broadcast %1 : vector<8x1xi32> to vector<8x40xi32>
    %4 = arith.cmpi eq, %2, %3 : vector<8x40xi32>
    %cst = arith.constant 0.000000e+00 : f32
    %5 = vector.broadcast %cst : f32 to vector<8x40xf32>
    %6 = arith.select %4, %0, %5 : vector<8x40xi1>, vector<8x40xf32>
    %cst_3 = arith.constant dense<0.000000e+00> : vector<8xf32>
    %7 = vector.multi_reduction <add>, %6, %cst_3 [1] : vector<8x40xf32> to vector<8xf32>
    %8 = vector.shape_cast %7 : vector<8xf32> to vector<8x1xf32>
    %cst_4 = arith.constant -1.000000e+04 : f32
    %9 = vector.broadcast %cst_4 : f32 to vector<8x40xf32>
    %10 = arith.select %4, %9, %0 : vector<8x40xi1>, vector<8x40xf32>
    %cst_5 = arith.constant dense<0xFF800000> : vector<8xf32>
    %11 = vector.multi_reduction <maximumf>, %10, %cst_5 [1] : vector<8x40xf32> to vector<8xf32>
    %12 = vector.shape_cast %11 : vector<8xf32> to vector<8x1xf32>
    %13 = arith.subf %12, %8 : vector<8x1xf32>
    %cst_6 = arith.constant 0.000000e+00 : f32
    %14 = vector.broadcast %cst_6 : f32 to vector<8x1xf32>
    %15 = arith.addf %13, %14 : vector<8x1xf32>
    %cst_7 = arith.constant 0.000000e+00 : f32
    %16 = vector.broadcast %cst_7 : f32 to vector<8x1xf32>
    %17 = arith.maximumf %15, %16 : vector<8x1xf32>
    %cst_8 = arith.constant 1.250000e-01 : f32
    %18 = vector.broadcast %cst_8 : f32 to vector<8x1xf32>
    %19 = arith.mulf %17, %18 : vector<8x1xf32>
    %20 = vector.shape_cast %19 : vector<8x1xf32> to vector<1x8x1xf32>
    %cst_9 = arith.constant dense<0.000000e+00> : vector<1xf32>
    %21 = vector.multi_reduction <add>, %20, %cst_9 [1, 2] : vector<1x8x1xf32> to vector<1xf32>
    %22 = vector.shape_cast %21 : vector<1xf32> to vector<1x1x1xf32>
    %23 = vector.extract %22[0, 0, 0] : f32 from vector<1x1x1xf32>
    %c0_10 = arith.constant 0 : index
    %c0_11 = arith.constant 0 : index
    %24 = memref.load %arg2[%c0_10, %c0_11] : memref<1x1xf32, #tpu.memory_space<smem>>
    memref.store %23, %arg2[%c0_10, %c0_11] : memref<1x1xf32, #tpu.memory_space<smem>>
    return
  }
}

</mosaic_0001>

<llo_original>
// kernel: tpu_custom_call.1
$region0: #{tpu_custom_call.1}
  #allocation0 [shape = 'u32[]', space=smem, size = 0x4, offset = 0x4, fixed_abs, tag = 'smem constant byte address 0x4 - core index']
  #allocation1 [shape = 'u32[144,128]{1,0:T(1,128)}', space=vmem, size = 0x12000, scoped, tag = 'internal scratch']
  %s0 = inlined_call_operand.vmem [shape: f32[8,40], index: 0, kind: input, shape index: {}]
  %s1 = inlined_call_operand.vmem [shape: s32[8,1], index: 1, kind: input, shape index: {}]
  %s2 = inlined_call_operand.hbm [shape: f32[1,1], index: 2, kind: output, shape index: {}]
  %s3 = sld [smem:[#allocation0]]
  $region18: #{tpu_custom_call.1} parent=0
    _
  %s5 = ssub.s32 1, %s3
  %s6 = scalar_select 0, %s5, %s3
  $region1: #{tpu_custom_call.1} parent=0
    #allocation2 [shape = 'u8[512]{0}', space=smem, size = 0x200, scoped, tag = 'output window, operand 0, single buffered']
    #allocation3 [shape = 's32[1]{0}', space=sflag, size = 0x4, scoped, tag = 'scoped memory for tpu_custom_call.1']
    %7 = vsyncpa [#allocation3], 0
    // Predicated region
    $region2: #{tpu_custom_call.1} parent=1 // pred_check
      _
    $region3: #{tpu_custom_call.1} parent=1 // pred_check_branch
      %9 = sbr.rel (0) target = $region5
    $region4: #{tpu_custom_call.1} parent=1 // pred_region
      _
    $region5: #{tpu_custom_call.1} parent=1 // pred_fallthru
      _
    // Predicated region
    $region6: #{tpu_custom_call.1} parent=1 // pred_check
      _
    $region7: #{tpu_custom_call.1} parent=1 // pred_check_branch
      %11 = sbr.rel (0) target = $region9
    $region8: #{tpu_custom_call.1} parent=1 // pred_region
      _
    $region9: #{tpu_custom_call.1} parent=1 // pred_fallthru
      _
    %v12 = vld [vmem:[%s0] sm:$0xff]
    %v13 = vld [vmem:[%s1] sm:$0xff]
    %v14 = vlaneseq
    %v15 = vand.u32 %v14, 127
    %16 = vset.pattern.permute.xlu0 0
    %17 = vperm.xlu0 %16, %v13
    %v18 = vpop.permute.xlu0 %17
    %vm19 = vcmp.eq.s32.totalorder %v15, %v18
    %v20 = vsel %vm19, %v12, 0.0
    %vm21 = vcmask 326656
    %v22 = vsel %vm21, %v20, 0.0
    %23 = vadd.xlane.f32.xlu0 %v22
    %v24 = vpop.xlane.xlu0 %23
    %v25 = vsel %vm19, -10000.0, %v12
    %v26 = vsel %vm21, %v25, -inf
    %27 = vmax.xlane.f32.xlu0 %v26
    %v28 = vpop.xlane.xlu0 %27
    %v29 = vsub.f32 %v28, %v24
    %v30 = vadd.f32 %v29, 0.0
    %v31 = vmax.f32 %v30, 0.0
    %v32 = vmul.f32 %v31, 0.125
    %vm33 = vcmask 7168
    %v34 = vsel %vm33, %v32, 0.0
    %35 = vadd.xlane.f32.xlu0 %v34
    %v36 = vpop.xlane.xlu0 %35
    %v37 = vrot.slane %v36, 4
    %v38 = vadd.f32 %v36, %v37
    %v39 = vrot.slane %v38, 2
    %v40 = vadd.f32 %v38, %v39
    %v41 = vrot.slane %v40, 1
    %v42 = vadd.f32 %v40, %v41
    %s43 = vtos %v42
    %s44 = scalar_lea.smem [#allocation2], 0
    %45 = sst [smem:[%s44]] %s43
    // Predicated region
    $region10: #{tpu_custom_call.1} parent=1 // pred_check
      _
    $region11: #{tpu_custom_call.1} parent=1 // pred_check_branch
      %47 = sbr.rel (0) target = $region13
    $region12: #{tpu_custom_call.1} parent=1 // pred_region
      %s49 = ssub.s32 16, 16
      %50 = vsyncadd [#allocation3], %s49
      %53 = dma.smem_to_hbm [#allocation2], 16, %s2, [#allocation3]
    $region13: #{tpu_custom_call.1} parent=1 // pred_fallthru
      _
    // Predicated region
    $region14: #{tpu_custom_call.1} parent=1 // pred_check
      _
    $region15: #{tpu_custom_call.1} parent=1 // pred_check_branch
      %55 = sbr.rel (0) target = $region17
    $region16: #{tpu_custom_call.1} parent=1 // pred_region
      %56 = dma.done [#allocation3], 16
    $region17: #{tpu_custom_call.1} parent=1 // pred_fallthru
      _
    %57 = sfence
    %58 = vsyncpa [#allocation3], 1

</llo_original>
